<compile_context>
chip_gen: v7x
topology: tpu7x:2x2x1
jax: 0.10.0
libtpu: 0.0.40
codegen_flags: <defaults>
</compile_context>

<pallas_src>
import jax
import jax.numpy as jnp
from jax.experimental import pallas as pl
from jax.experimental.pallas import tpu as pltpu


def _qnet_kernel(p_ref, x_ref, o_ref):
    # p_ref: f32[16] in SMEM, packed as
    #   [W1[0,0..3], W1[1,0..3], b1[0..1], W2[0,0..1], W2[1,0..1], b2[0..1]]
    # x_ref: [4, S_tile, 128] (feature-major slabs); o_ref: f32[2, S_tile, 128]
    x0 = x_ref[0].astype(jnp.float32)
    x1 = x_ref[1].astype(jnp.float32)
    x2 = x_ref[2].astype(jnp.float32)
    x3 = x_ref[3].astype(jnp.float32)

    # Layer 1: h_j = relu(sum_k x_k * W1[j,k] + b1[j])   (pure VPU FMAs,
    # scalars broadcast from SMEM, every op on full [S_tile,128] vreg slabs).
    h0 = x0 * p_ref[0] + x1 * p_ref[1] + x2 * p_ref[2] + x3 * p_ref[3] + p_ref[8]
    h1 = x0 * p_ref[4] + x1 * p_ref[5] + x2 * p_ref[6] + x3 * p_ref[7] + p_ref[9]
    h0 = jnp.maximum(h0, 0.0)
    h1 = jnp.maximum(h1, 0.0)

    # Layer 2: y_j = sum_k h_k * W2[j,k] + b2[j]
    o_ref[0] = (h0 * p_ref[10] + h1 * p_ref[11] + p_ref[14]).astype(o_ref.dtype)
    o_ref[1] = (h0 * p_ref[12] + h1 * p_ref[13] + p_ref[15]).astype(o_ref.dtype)


def pack_qnet_params(w1, b1, w2, b2):
    """Pack nn.Linear(4,2)/nn.Linear(2,2) params into one f32[16] array.

    Call ONCE per weight set (outside the per-step hot path)."""
    return jnp.concatenate(
        [jnp.asarray(w1, jnp.float32).reshape(-1),
         jnp.asarray(b1, jnp.float32).reshape(-1),
         jnp.asarray(w2, jnp.float32).reshape(-1),
         jnp.asarray(b2, jnp.float32).reshape(-1)]
    )


def _run_qnet(params, x_fm, s_tile):
    """x_fm: [4, S, 128] with S % s_tile == 0.  Returns f32[2, S, 128]."""
    _, s, _ = x_fm.shape
    grid = (s // s_tile,)
    return pl.pallas_call(
        _qnet_kernel,
        out_shape=jax.ShapeDtypeStruct((2, s, 128), jnp.float32),
        grid=grid,
        in_specs=[
            pl.BlockSpec(memory_space=pltpu.MemorySpace.SMEM),        # packed params
            pl.BlockSpec((4, s_tile, 128), lambda i: (0, i, 0)),      # x slab tile
        ],
        out_specs=pl.BlockSpec((2, s_tile, 128), lambda i: (0, i, 0)),
        compiler_params=pltpu.CompilerParams(
            dimension_semantics=("parallel",)),
    )(params, x_fm)


def qnet_forward_featmajor(x_fm, params, *, s_tile_max=512):
    """Hot path: x_fm is feature-major [4, S, 128] (any float dtype).

    Returns f32[2, S, 128] (q-values per action, batch on (S,128) axes).
    No wrapper-side transposes; only the ragged tail of the last tile is
    padded, and only if S does not divide the tile."""
    if x_fm.ndim != 3 or x_fm.shape[0] != 4 or x_fm.shape[2] != 128:
        raise ValueError("expected feature-major input of shape [4, S, 128]")
    s = x_fm.shape[1]

    if s <= s_tile_max:
        # Single block == full array: layout-legal for any S, grid=(1,).
        return _run_qnet(params, x_fm, s)

    s_tile = max(8, (s_tile_max // 8) * 8)      # sublane-aligned tile
    s_pad = ((s + s_tile - 1) // s_tile) * s_tile
    if s_pad != s:
        # Pad only the ragged remainder; padded rows compute on zeros and are
        # sliced away below (no NaN-sensitive reduction inside the kernel).
        x_fm = jnp.pad(x_fm, ((0, 0), (0, s_pad - s), (0, 0)))
    out = _run_qnet(params, x_fm, s_tile)
    return out[:, :s, :] if s_pad != s else out


def qnet_forward(x, params, *, s_tile_max=512):
    """Compatibility wrapper: x is PyTorch-layout [B, 4]; returns f32[B, 2].

    For the replay-buffer hot loop prefer storing states feature-major and
    calling qnet_forward_featmajor directly (avoids the transpose copy here)."""
    b = x.shape[0]
    s = -(-b // 128)                  # cdiv(B, 128)
    b_pad = s * 128
    xt = jnp.asarray(x).T             # [4, B]   (layout plumbing, compat only)
    if b_pad != b:
        xt = jnp.pad(xt, ((0, 0), (0, b_pad - b)))
    x_fm = xt.reshape(4, s, 128)
    out = qnet_forward_featmajor(x_fm, params, s_tile_max=s_tile_max)
    return out.reshape(2, b_pad)[:, :b].T


def _ref_forward(x, w1, b1, w2, b2):
    h = jnp.maximum(x @ w1.T + b1, 0.0)
    return h @ w2.T + b2


if __name__ == "__main__":
    key = jax.random.PRNGKey(0)
    kx, k1, k2, k3, k4 = jax.random.split(key, 5)

    # Deterministic parameters (shapes match nn.Linear(4,2) and nn.Linear(2,2)).
    w1 = jax.random.normal(k1, (2, 4), dtype=jnp.float32) * 0.5
    b1 = jax.random.normal(k2, (2,), dtype=jnp.float32) * 0.1
    w2 = jax.random.normal(k3, (2, 2), dtype=jnp.float32) * 0.5
    b2 = jax.random.normal(k4, (2,), dtype=jnp.float32) * 0.1
    params = pack_qnet_params(w1, b1, w2, b2)

    # 1) Small batch (B=8): single full-array block, grid=(1,).
    B = 8
    x = jax.random.normal(kx, (B, 4), dtype=jnp.float32)
    out = jax.block_until_ready(qnet_forward(x, params))
    ref = _ref_forward(x, w1, b1, w2, b2)
    assert out.shape == (B, 2), out.shape
    assert jnp.allclose(out, ref, atol=1e-5, rtol=1e-5)

    # 2) Non-multiple-of-128 batch with a small tile cap to exercise the
    #    multi-step grid + ragged-tail padding path (S=24, s_tile=8, grid=3).
    B2 = 3000
    x2 = jax.random.normal(kx, (B2, 4), dtype=jnp.float32)
    out2 = jax.block_until_ready(qnet_forward(x2, params, s_tile_max=8))
    ref2 = _ref_forward(x2, w1, b1, w2, b2)
    assert out2.shape == (B2, 2), out2.shape
    assert jnp.allclose(out2, ref2, atol=1e-5, rtol=1e-5)

    # 3) Feature-major hot path (no wrapper transposes): [4, S=32, 128],
    #    s_tile=16 -> grid=(2,) so both v7x TensorCores get work.
    S3 = 32
    x3 = jax.random.normal(kx, (4, S3, 128), dtype=jnp.float32)
    out3 = jax.block_until_ready(
        qnet_forward_featmajor(x3, params, s_tile_max=16))
    ref3 = _ref_forward(x3.reshape(4, -1).T, w1, b1, w2, b2).T.reshape(2, S3, 128)
    assert out3.shape == (2, S3, 128), out3.shape
    assert jnp.allclose(out3, ref3, atol=1e-5, rtol=1e-5)

    print("KERNEL_OK")
</pallas_src>

<mosaic_0001>
module attributes {stable_mosaic.version = 11 : i64} {
  func.func @_qnet_kernel(%arg0: i32, %arg1: memref<16xf32, #tpu.memory_space<smem>>, %arg2: memref<4x1x128xf32, #tpu.memory_space<vmem>>, %arg3: memref<2x1x128xf32, #tpu.memory_space<vmem>>) attributes {dimension_semantics = [#tpu.dimension_semantics<parallel>], iteration_bounds = array<i64: 1>, scalar_prefetch = 0 : i64, scratch_operands = 0 : i64, tpu.core_type = #tpu.core_type<tc>, window_params = [{transform_indices = @transform_0, window_bounds = array<i64: 16>}, {transform_indices = @transform_1, window_bounds = array<i64: 4, 1, 128>}, {transform_indices = @transform_2, window_bounds = array<i64: 2, 1, 128>}]} {
    %c0 = arith.constant 0 : index
    %c0_0 = arith.constant 0 : index
    %c0_1 = arith.constant 0 : index
    %0 = vector.load %arg2[%c0, %c0_0, %c0_1] : memref<4x1x128xf32, #tpu.memory_space<vmem>>, vector<1x1x128xf32>
    %1 = vector.shape_cast %0 : vector<1x1x128xf32> to vector<1x128xf32>
    %c1 = arith.constant 1 : index
    %c0_2 = arith.constant 0 : index
    %c0_3 = arith.constant 0 : index
    %2 = vector.load %arg2[%c1, %c0_2, %c0_3] : memref<4x1x128xf32, #tpu.memory_space<vmem>>, vector<1x1x128xf32>
    %3 = vector.shape_cast %2 : vector<1x1x128xf32> to vector<1x128xf32>
    %c2 = arith.constant 2 : index
    %c0_4 = arith.constant 0 : index
    %c0_5 = arith.constant 0 : index
    %4 = vector.load %arg2[%c2, %c0_4, %c0_5] : memref<4x1x128xf32, #tpu.memory_space<vmem>>, vector<1x1x128xf32>
    %5 = vector.shape_cast %4 : vector<1x1x128xf32> to vector<1x128xf32>
    %c3 = arith.constant 3 : index
    %c0_6 = arith.constant 0 : index
    %c0_7 = arith.constant 0 : index
    %6 = vector.load %arg2[%c3, %c0_6, %c0_7] : memref<4x1x128xf32, #tpu.memory_space<vmem>>, vector<1x1x128xf32>
    %7 = vector.shape_cast %6 : vector<1x1x128xf32> to vector<1x128xf32>
    %c0_8 = arith.constant 0 : index
    %8 = memref.load %arg1[%c0_8] : memref<16xf32, #tpu.memory_space<smem>>
    %9 = vector.broadcast %8 : f32 to vector<1x128xf32>
    %10 = arith.mulf %1, %9 : vector<1x128xf32>
    %c1_9 = arith.constant 1 : index
    %11 = memref.load %arg1[%c1_9] : memref<16xf32, #tpu.memory_space<smem>>
    %12 = vector.broadcast %11 : f32 to vector<1x128xf32>
    %13 = arith.mulf %3, %12 : vector<1x128xf32>
    %14 = arith.addf %10, %13 : vector<1x128xf32>
    %c2_10 = arith.constant 2 : index
    %15 = memref.load %arg1[%c2_10] : memref<16xf32, #tpu.memory_space<smem>>
    %16 = vector.broadcast %15 : f32 to vector<1x128xf32>
    %17 = arith.mulf %5, %16 : vector<1x128xf32>
    %18 = arith.addf %14, %17 : vector<1x128xf32>
    %c3_11 = arith.constant 3 : index
    %19 = memref.load %arg1[%c3_11] : memref<16xf32, #tpu.memory_space<smem>>
    %20 = vector.broadcast %19 : f32 to vector<1x128xf32>
    %21 = arith.mulf %7, %20 : vector<1x128xf32>
    %22 = arith.addf %18, %21 : vector<1x128xf32>
    %c8 = arith.constant 8 : index
    %23 = memref.load %arg1[%c8] : memref<16xf32, #tpu.memory_space<smem>>
    %24 = vector.broadcast %23 : f32 to vector<1x128xf32>
    %25 = arith.addf %22, %24 : vector<1x128xf32>
    %c4 = arith.constant 4 : index
    %26 = memref.load %arg1[%c4] : memref<16xf32, #tpu.memory_space<smem>>
    %27 = vector.broadcast %26 : f32 to vector<1x128xf32>
    %28 = arith.mulf %1, %27 : vector<1x128xf32>
    %c5 = arith.constant 5 : index
    %29 = memref.load %arg1[%c5] : memref<16xf32, #tpu.memory_space<smem>>
    %30 = vector.broadcast %29 : f32 to vector<1x128xf32>
    %31 = arith.mulf %3, %30 : vector<1x128xf32>
    %32 = arith.addf %28, %31 : vector<1x128xf32>
    %c6 = arith.constant 6 : index
    %33 = memref.load %arg1[%c6] : memref<16xf32, #tpu.memory_space<smem>>
    %34 = vector.broadcast %33 : f32 to vector<1x128xf32>
    %35 = arith.mulf %5, %34 : vector<1x128xf32>
    %36 = arith.addf %32, %35 : vector<1x128xf32>
    %c7 = arith.constant 7 : index
    %37 = memref.load %arg1[%c7] : memref<16xf32, #tpu.memory_space<smem>>
    %38 = vector.broadcast %37 : f32 to vector<1x128xf32>
    %39 = arith.mulf %7, %38 : vector<1x128xf32>
    %40 = arith.addf %36, %39 : vector<1x128xf32>
    %c9 = arith.constant 9 : index
    %41 = memref.load %arg1[%c9] : memref<16xf32, #tpu.memory_space<smem>>
    %42 = vector.broadcast %41 : f32 to vector<1x128xf32>
    %43 = arith.addf %40, %42 : vector<1x128xf32>
    %cst = arith.constant 0.000000e+00 : f32
    %44 = vector.broadcast %cst : f32 to vector<1x128xf32>
    %45 = arith.maximumf %25, %44 : vector<1x128xf32>
    %cst_12 = arith.constant 0.000000e+00 : f32
    %46 = vector.broadcast %cst_12 : f32 to vector<1x128xf32>
    %47 = arith.maximumf %43, %46 : vector<1x128xf32>
    %c10 = arith.constant 10 : index
    %48 = memref.load %arg1[%c10] : memref<16xf32, #tpu.memory_space<smem>>
    %49 = vector.broadcast %48 : f32 to vector<1x128xf32>
    %50 = arith.mulf %45, %49 : vector<1x128xf32>
    %c11 = arith.constant 11 : index
    %51 = memref.load %arg1[%c11] : memref<16xf32, #tpu.memory_space<smem>>
    %52 = vector.broadcast %51 : f32 to vector<1x128xf32>
    %53 = arith.mulf %47, %52 : vector<1x128xf32>
    %54 = arith.addf %50, %53 : vector<1x128xf32>
    %c14 = arith.constant 14 : index
    %55 = memref.load %arg1[%c14] : memref<16xf32, #tpu.memory_space<smem>>
    %56 = vector.broadcast %55 : f32 to vector<1x128xf32>
    %57 = arith.addf %54, %56 : vector<1x128xf32>
    %c0_13 = arith.constant 0 : index
    %c0_14 = arith.constant 0 : index
    %c0_15 = arith.constant 0 : index
    %58 = vector.load %arg3[%c0_13, %c0_14, %c0_15] : memref<2x1x128xf32, #tpu.memory_space<vmem>>, vector<1x1x128xf32>
    %59 = vector.shape_cast %58 : vector<1x1x128xf32> to vector<1x128xf32>
    %60 = vector.shape_cast %57 : vector<1x128xf32> to vector<1x1x128xf32>
    tpu.vector_store %arg3[%c0_13, %c0_14, %c0_15], %60 {strides = array<i32>} : memref<2x1x128xf32, #tpu.memory_space<vmem>>, vector<1x1x128xf32>,
    %c12 = arith.constant 12 : index
    %61 = memref.load %arg1[%c12] : memref<16xf32, #tpu.memory_space<smem>>
    %62 = vector.broadcast %61 : f32 to vector<1x128xf32>
    %63 = arith.mulf %45, %62 : vector<1x128xf32>
    %c13 = arith.constant 13 : index
    %64 = memref.load %arg1[%c13] : memref<16xf32, #tpu.memory_space<smem>>
    %65 = vector.broadcast %64 : f32 to vector<1x128xf32>
    %66 = arith.mulf %47, %65 : vector<1x128xf32>
    %67 = arith.addf %63, %66 : vector<1x128xf32>
    %c15 = arith.constant 15 : index
    %68 = memref.load %arg1[%c15] : memref<16xf32, #tpu.memory_space<smem>>
    %69 = vector.broadcast %68 : f32 to vector<1x128xf32>
    %70 = arith.addf %67, %69 : vector<1x128xf32>
    %c1_16 = arith.constant 1 : index
    %c0_17 = arith.constant 0 : index
    %c0_18 = arith.constant 0 : index
    %71 = vector.load %arg3[%c1_16, %c0_17, %c0_18] : memref<2x1x128xf32, #tpu.memory_space<vmem>>, vector<1x1x128xf32>
    %72 = vector.shape_cast %71 : vector<1x1x128xf32> to vector<1x128xf32>
    %73 = vector.shape_cast %70 : vector<1x128xf32> to vector<1x1x128xf32>
    tpu.vector_store %arg3[%c1_16, %c0_17, %c0_18], %73 {strides = array<i32>} : memref<2x1x128xf32, #tpu.memory_space<vmem>>, vector<1x1x128xf32>,
    return
  }
  func.func @transform_0(%arg0: i32) -> i32 {
    %c0_i32 = arith.constant 0 : i32
    %c0_i32_0 = arith.constant 0 : i32
    return %c0_i32 : i32
  }
  func.func @transform_1(%arg0: i32) -> (i32, i32, i32) {
    %c0_i32 = arith.constant 0 : i32
    %c0_i32_0 = arith.constant 0 : i32
    %c0_i32_1 = arith.constant 0 : i32
    return %c0_i32, %arg0, %c0_i32_0 : i32, i32, i32
  }
  func.func @transform_2(%arg0: i32) -> (i32, i32, i32) {
    %c0_i32 = arith.constant 0 : i32
    %c0_i32_0 = arith.constant 0 : i32
    %c0_i32_1 = arith.constant 0 : i32
    return %c0_i32, %arg0, %c0_i32_0 : i32, i32, i32
  }
}

</mosaic_0001>

<llo_original>
// kernel: tpu_custom_call.1
$region0: #{tpu_custom_call.1}
  #allocation0 [shape = 'u32[]', space=smem, size = 0x4, offset = 0x4, fixed_abs, tag = 'smem constant byte address 0x4 - core index']
  #allocation1 [shape = 'u32[144,128]{1,0:T(1,128)}', space=vmem, size = 0x12000, scoped, tag = 'internal scratch']
  %s0 = inlined_call_operand.hbm [shape: f32[16], index: 0, kind: input, shape index: {}]
  %s1 = inlined_call_operand.hbm [shape: f32[4,1,128], index: 1, kind: input, shape index: {}]
  %s2 = inlined_call_operand.hbm [shape: f32[2,1,128], index: 2, kind: output, shape index: {}]
  %s3 = sld [smem:[#allocation0]]
  $region26: #{tpu_custom_call.1} parent=0
    _
  %s5 = ssub.s32 1, %s3
  %s6 = scalar_select 0, %s5, %s3
  $region1: #{tpu_custom_call.1} parent=0
    #allocation2 [shape = 'u8[512]{0}', space=smem, size = 0x200, scoped, tag = 'input window, operand 0, single buffered']
    #allocation3 [shape = 's32[1]{0}', space=sflag, size = 0x4, scoped, tag = 'scoped memory for tpu_custom_call.1']
    #allocation4 [shape = 's32[1]{0}', space=sflag, size = 0x4, scoped, tag = 'scoped memory for tpu_custom_call.1']
    #allocation5 [shape = 's32[1]{0}', space=sflag, size = 0x4, scoped, tag = 'scoped memory for tpu_custom_call.1']
    #allocation6 [shape = 'u8[2048]{0}', space=vmem, size = 0x800, scoped, tag = 'input window, operand 1, single buffered']
    #allocation7 [shape = 'u8[1024]{0}', space=vmem, size = 0x400, scoped, tag = 'output window, operand 0, single buffered']
    %7 = vsyncpa [#allocation5], 0
    %8 = vsyncpa [#allocation3], 0
    %9 = vsyncpa [#allocation4], 0
    // Predicated region
    $region2: #{tpu_custom_call.1} parent=1 // pred_check
      _
    $region3: #{tpu_custom_call.1} parent=1 // pred_check_branch
      %11 = sbr.rel (0) target = $region5
    $region4: #{tpu_custom_call.1} parent=1 // pred_region
      %s13 = ssub.s32 16, 16
      %14 = vsyncadd [#allocation5], %s13
      %17 = dma.hbm_to_smem %s0, 16, [#allocation2], [#allocation5]
    $region5: #{tpu_custom_call.1} parent=1 // pred_fallthru
      _
    // Predicated region
    $region6: #{tpu_custom_call.1} parent=1 // pred_check
      _
    $region7: #{tpu_custom_call.1} parent=1 // pred_check_branch
      %19 = sbr.rel (0) target = $region9
    $region8: #{tpu_custom_call.1} parent=1 // pred_region
      %s21 = ssub.s32 64, 64
      %22 = vsyncadd [#allocation3], %s21
      %s23 = sshll.u32 [#allocation6], 4
      %s24 = int_to_ptr.vmem [resolvable:$true] %s23
      %29 = dma.hbm_to_vmem [thread:$0]  %s1, 64, %s24, [#allocation3], 16, 16, 1
    $region9: #{tpu_custom_call.1} parent=1 // pred_fallthru
      _
    // Predicated region
    $region10: #{tpu_custom_call.1} parent=1 // pred_check
      _
    $region11: #{tpu_custom_call.1} parent=1 // pred_check_branch
      %31 = sbr.rel (0) target = $region13
    $region12: #{tpu_custom_call.1} parent=1 // pred_region
      %32 = dma.done [#allocation5], 16
    $region13: #{tpu_custom_call.1} parent=1 // pred_fallthru
      _
    // Predicated region
    $region14: #{tpu_custom_call.1} parent=1 // pred_check
      _
    $region15: #{tpu_custom_call.1} parent=1 // pred_check_branch
      %34 = sbr.rel (0) target = $region17
    $region16: #{tpu_custom_call.1} parent=1 // pred_region
      %35 = dma.done [#allocation3], 64
    $region17: #{tpu_custom_call.1} parent=1 // pred_fallthru
      _
    %36 = sfence
    %v37 = vld [vmem:[#allocation6] sm:$0x1]
    %s38 = scalar_lea.vmem [#allocation6], 1
    %v39 = vld [vmem:[%s38] sm:$0x1]
    %s40 = scalar_lea.vmem [#allocation6], 2
    %v41 = vld [vmem:[%s40] sm:$0x1]
    %s42 = scalar_lea.vmem [#allocation6], 3
    %v43 = vld [vmem:[%s42] sm:$0x1]
    %s44 = sld [smem:[#allocation2]]
    %v45 = vstv %s44
    %v46 = vmul.f32 %v37, %v45
    %s47 = sld [smem:[#allocation2 + $0x1]]
    %v48 = vstv %s47
    %v49 = vmul.f32 %v39, %v48
    %v50 = vadd.f32 %v46, %v49
    %s51 = sld [smem:[#allocation2 + $0x2]]
    %v52 = vstv %s51
    %v53 = vmul.f32 %v41, %v52
    %v54 = vadd.f32 %v50, %v53
    %s55 = sld [smem:[#allocation2 + $0x3]]
    %v56 = vstv %s55
    %v57 = vmul.f32 %v43, %v56
    %v58 = vadd.f32 %v54, %v57
    %s59 = sld [smem:[#allocation2 + $0x8]]
    %v60 = vstv %s59
    %v61 = vadd.f32 %v58, %v60
    %s62 = sld [smem:[#allocation2 + $0x4]]
    %v63 = vstv %s62
    %v64 = vmul.f32 %v37, %v63
    %s65 = sld [smem:[#allocation2 + $0x5]]
    %v66 = vstv %s65
    %v67 = vmul.f32 %v39, %v66
    %v68 = vadd.f32 %v64, %v67
    %s69 = sld [smem:[#allocation2 + $0x6]]
    %v70 = vstv %s69
    %v71 = vmul.f32 %v41, %v70
    %v72 = vadd.f32 %v68, %v71
    %s73 = sld [smem:[#allocation2 + $0x7]]
    %v74 = vstv %s73
    %v75 = vmul.f32 %v43, %v74
    %v76 = vadd.f32 %v72, %v75
    %s77 = sld [smem:[#allocation2 + $0x9]]
    %v78 = vstv %s77
    %v79 = vadd.f32 %v76, %v78
    %v80 = vmax.f32 %v61, 0.0
    %v81 = vmax.f32 %v79, 0.0
    %s82 = sld [smem:[#allocation2 + $0xa]]
    %v83 = vstv %s82
    %v84 = vmul.f32 %v80, %v83
    %s85 = sld [smem:[#allocation2 + $0xb]]
    %v86 = vstv %s85
    %v87 = vmul.f32 %v81, %v86
    %v88 = vadd.f32 %v84, %v87
    %s89 = sld [smem:[#allocation2 + $0xe]]
    %v90 = vstv %s89
    %v91 = vadd.f32 %v88, %v90
    %92 = vst [vmem:[#allocation7] sm:$0x1] %v91
    %s93 = sld [smem:[#allocation2 + $0xc]]
    %v94 = vstv %s93
    %v95 = vmul.f32 %v80, %v94
    %s96 = sld [smem:[#allocation2 + $0xd]]
    %v97 = vstv %s96
    %v98 = vmul.f32 %v81, %v97
    %v99 = vadd.f32 %v95, %v98
    %s100 = sld [smem:[#allocation2 + $0xf]]
    %v101 = vstv %s100
    %v102 = vadd.f32 %v99, %v101
    %s103 = scalar_lea.vmem [#allocation7], 1
    %104 = vst [vmem:[%s103] sm:$0x1] %v102
    // Predicated region
    $region18: #{tpu_custom_call.1} parent=1 // pred_check
      _
    $region19: #{tpu_custom_call.1} parent=1 // pred_check_branch
      %106 = sbr.rel (0) target = $region21
    $region20: #{tpu_custom_call.1} parent=1 // pred_region
      %s108 = ssub.s32 32, 32
      %109 = vsyncadd [#allocation4], %s108
      %s110 = sshll.u32 [#allocation7], 4
      %s111 = int_to_ptr.vmem [resolvable:$true] %s110
      %116 = dma.vmem_to_hbm [thread:$0]  %s111, 32, %s2, [#allocation4], 16, 16, 1
    $region21: #{tpu_custom_call.1} parent=1 // pred_fallthru
      _
    // Predicated region
    $region22: #{tpu_custom_call.1} parent=1 // pred_check
      _
    $region23: #{tpu_custom_call.1} parent=1 // pred_check_branch
      %118 = sbr.rel (0) target = $region25
    $region24: #{tpu_custom_call.1} parent=1 // pred_region
      %119 = dma.done [#allocation4], 32
    $region25: #{tpu_custom_call.1} parent=1 // pred_fallthru
      _
    %120 = vsyncpa [#allocation3], 1
    %121 = vsyncpa [#allocation4], 1
    %122 = vsyncpa [#allocation5], 1

</llo_original>
